<compile_context>
chip_gen: v7x
topology: tpu7x:2x2x1
jax: 0.10.0
libtpu: 0.0.40
codegen_flags: <defaults>
</compile_context>

<pallas_src>
import math

import jax
import jax.numpy as jnp
from jax.experimental import pallas as pl
from jax.experimental.pallas import tpu as pltpu


def _scaler_kernel(x_ref, s_ref, o_ref):
    # x_ref: (R, C) tile, s_ref: (1, C) row -> broadcasts over the row axis.
    o_ref[...] = (x_ref[...] * s_ref[...]).astype(o_ref.dtype)


def dinov2_scaler(x: jax.Array, scaler: jax.Array) -> jax.Array:
    """Elementwise x * scaler, scaler broadcast along the last (width) axis."""
    orig_shape = x.shape
    W = orig_shape[-1]
    assert scaler.shape == (W,), f"scaler must be ({W},), got {scaler.shape}"

    # PyTorch promotion semantics: multiply and return in the promoted dtype.
    out_dtype = jnp.result_type(x.dtype, scaler.dtype)
    scaler = scaler.astype(out_dtype)  # hoisted cast (once, in the wrapper)

    rows = math.prod(orig_shape[:-1]) if len(orig_shape) > 1 else 1
    total = rows * W

    # Lane-dense repack for narrow widths (free reshape: contiguous collapse).
    if W % 128 != 0 and 128 % W == 0 and total % 128 == 0:
        cols = 128
        x2 = x.reshape(total // 128, 128)
        s2 = jnp.tile(scaler, 128 // W).reshape(1, 128)
    else:
        # Production DINOv2 widths (384/768/1024/1536) are multiples of 128
        # and stay on the lane axis unchanged.  Odd widths are still legal:
        # the block spans the full last dim of x2.
        cols = W
        x2 = x.reshape(rows, W)
        s2 = scaler.reshape(1, W)

    n_rows = x2.shape[0]

    # ~2 MiB lane-dense row tile, aligned to the sublane packing of the widest
    # dtype in flight (f32 -> 8 rows, bf16 -> 16, int8 -> 32), or full extent.
    in_itemsize = jnp.dtype(x.dtype).itemsize
    out_itemsize = jnp.dtype(out_dtype).itemsize
    itemsize = max(in_itemsize, out_itemsize)
    row_align = 8 * max(1, 4 // min(in_itemsize, out_itemsize))
    target_bytes = 2 * 1024 * 1024
    block_rows = (target_bytes // (cols * itemsize)) // row_align * row_align
    block_rows = max(row_align, block_rows)
    if block_rows >= n_rows:
        block_rows = n_rows  # full extent is always a legal block dim

    grid = (pl.cdiv(n_rows, block_rows),)

    out2 = pl.pallas_call(
        _scaler_kernel,
        out_shape=jax.ShapeDtypeStruct((n_rows, cols), out_dtype),
        grid_spec=pltpu.PrefetchScalarGridSpec(
            num_scalar_prefetch=0,
            grid=grid,
            in_specs=[
                pl.BlockSpec((block_rows, cols), lambda i: (i, 0)),
                pl.BlockSpec((1, cols), lambda i: (0, 0)),
            ],
            out_specs=pl.BlockSpec((block_rows, cols), lambda i: (i, 0)),
        ),
        compiler_params=pltpu.CompilerParams(
            dimension_semantics=("parallel",),
            # ~2 MiB block * (2 in + 2 out buffers) + scaler row ≈ 8 MiB:
            # comfortably inside every generation's VMEM (v7x: 64 MiB phys).
            vmem_limit_bytes=32 * 1024 * 1024,
        ),
    )(x2, s2)

    return out2.reshape(orig_shape)
    # TODO(synk): for peak end-to-end efficiency fold the scaler into the
    # adjacent projection weights / rely on XLA fusion; a standalone
    # elementwise multiply is capped by the HBM roofline.


if __name__ == "__main__":
    # Small shapes consistent with the module: batch=2, seq=8, width=32.
    B, S, W = 2, 8, 32
    key = jax.random.PRNGKey(0)
    kx, ks = jax.random.split(key)

    x = jax.random.normal(kx, (B, S, W), dtype=jnp.float32)
    # Deterministic stand-in for nn.Parameter(torch.empty(width)).
    scaler = jax.random.normal(ks, (W,), dtype=jnp.float32)

    out = dinov2_scaler(x, scaler)
    jax.block_until_ready(out)

    # Correctness check against the plain-JAX reference of the PyTorch forward.
    ref = x * scaler
    assert out.shape == x.shape and out.dtype == ref.dtype
    assert jnp.allclose(out, ref, atol=1e-6, rtol=1e-6)

    print("KERNEL_OK")
</pallas_src>

<mosaic_0001>
module attributes {stable_mosaic.version = 11 : i64} {
  func.func @_scaler_kernel(%arg0: i32, %arg1: memref<4x128xf32, #tpu.memory_space<vmem>>, %arg2: memref<1x128xf32, #tpu.memory_space<vmem>>, %arg3: memref<4x128xf32, #tpu.memory_space<vmem>>) attributes {dimension_semantics = [#tpu.dimension_semantics<parallel>], iteration_bounds = array<i64: 1>, scalar_prefetch = 0 : i64, scratch_operands = 0 : i64, tpu.core_type = #tpu.core_type<tc>, window_params = [{transform_indices = @transform_0, window_bounds = array<i64: 4, 128>}, {pipeline_mode = #tpu.pipeline_mode<synchronous>, transform_indices = @transform_1, window_bounds = array<i64: 1, 128>}, {transform_indices = @transform_2, window_bounds = array<i64: 4, 128>}]} {
    %c0 = arith.constant 0 : index
    %c0_0 = arith.constant 0 : index
    %0 = vector.load %arg1[%c0, %c0_0] : memref<4x128xf32, #tpu.memory_space<vmem>>, vector<4x128xf32>
    %c0_1 = arith.constant 0 : index
    %c0_2 = arith.constant 0 : index
    %1 = vector.load %arg2[%c0_1, %c0_2] : memref<1x128xf32, #tpu.memory_space<vmem>>, vector<1x128xf32>
    %2 = vector.broadcast %1 : vector<1x128xf32> to vector<4x128xf32>
    %3 = arith.mulf %0, %2 : vector<4x128xf32>
    %c0_3 = arith.constant 0 : index
    %c0_4 = arith.constant 0 : index
    %4 = vector.load %arg3[%c0_3, %c0_4] : memref<4x128xf32, #tpu.memory_space<vmem>>, vector<4x128xf32>
    tpu.vector_store %arg3[%c0_3, %c0_4], %3 {strides = array<i32>} : memref<4x128xf32, #tpu.memory_space<vmem>>, vector<4x128xf32>,
    return
  }
  func.func @transform_0(%arg0: i32) -> (i32, i32) {
    %c0_i32 = arith.constant 0 : i32
    %c0_i32_0 = arith.constant 0 : i32
    return %arg0, %c0_i32 : i32, i32
  }
  func.func @transform_1(%arg0: i32) -> (i32, i32) {
    %c0_i32 = arith.constant 0 : i32
    %c0_i32_0 = arith.constant 0 : i32
    %c0_i32_1 = arith.constant 0 : i32
    return %c0_i32, %c0_i32_0 : i32, i32
  }
  func.func @transform_2(%arg0: i32) -> (i32, i32) {
    %c0_i32 = arith.constant 0 : i32
    %c0_i32_0 = arith.constant 0 : i32
    return %arg0, %c0_i32 : i32, i32
  }
}

</mosaic_0001>

<llo_original>
// kernel: tpu_custom_call.1
$region0: #{tpu_custom_call.1}
  #allocation0 [shape = 'u32[]', space=smem, size = 0x4, offset = 0x4, fixed_abs, tag = 'smem constant byte address 0x4 - core index']
  #allocation1 [shape = 'u32[144,128]{1,0:T(1,128)}', space=vmem, size = 0x12000, scoped, tag = 'internal scratch']
  %s0 = inlined_call_operand.hbm [shape: f32[4,128], index: 0, kind: input, shape index: {}]
  %s1 = inlined_call_operand.vmem [shape: f32[1,128], index: 1, kind: input, shape index: {}]
  %s2 = inlined_call_operand.hbm [shape: f32[4,128], index: 2, kind: output, shape index: {}]
  %s3 = sld [smem:[#allocation0]]
  $region22: #{tpu_custom_call.1} parent=0
    _
  %s5 = ssub.s32 1, %s3
  %s6 = scalar_select 0, %s5, %s3
  $region1: #{tpu_custom_call.1} parent=0
    #allocation2 [shape = 'u8[2048]{0}', space=vmem, size = 0x800, scoped, tag = 'input window, operand 0, single buffered']
    #allocation3 [shape = 's32[1]{0}', space=sflag, size = 0x4, scoped, tag = 'scoped memory for tpu_custom_call.1']
    #allocation4 [shape = 's32[1]{0}', space=sflag, size = 0x4, scoped, tag = 'scoped memory for tpu_custom_call.1']
    #allocation5 [shape = 'u8[2048]{0}', space=vmem, size = 0x800, scoped, tag = 'output window, operand 0, single buffered']
    %7 = vsyncpa [#allocation3], 0
    %8 = vsyncpa [#allocation4], 0
    // Predicated region
    $region2: #{tpu_custom_call.1} parent=1 // pred_check
      _
    $region3: #{tpu_custom_call.1} parent=1 // pred_check_branch
      %10 = sbr.rel (0) target = $region5
    $region4: #{tpu_custom_call.1} parent=1 // pred_region
      %s12 = ssub.s32 64, 64
      %13 = vsyncadd [#allocation3], %s12
      %s15 = sshll.u32 [#allocation2], 4
      %s16 = int_to_ptr.vmem [resolvable:$true] %s15
      %18 = dma.hbm_to_vmem [thread:$0]  %s0, 64, %s16, [#allocation3]
    $region5: #{tpu_custom_call.1} parent=1 // pred_fallthru
      _
    // Predicated region
    $region6: #{tpu_custom_call.1} parent=1 // pred_check
      _
    $region7: #{tpu_custom_call.1} parent=1 // pred_check_branch
      %20 = sbr.rel (0) target = $region9
    $region8: #{tpu_custom_call.1} parent=1 // pred_region
      _
    $region9: #{tpu_custom_call.1} parent=1 // pred_fallthru
      _
    // Predicated region
    $region10: #{tpu_custom_call.1} parent=1 // pred_check
      _
    $region11: #{tpu_custom_call.1} parent=1 // pred_check_branch
      %22 = sbr.rel (0) target = $region13
    $region12: #{tpu_custom_call.1} parent=1 // pred_region
      %23 = dma.done [#allocation3], 64
    $region13: #{tpu_custom_call.1} parent=1 // pred_fallthru
      _
    %v24 = vld [vmem:[#allocation2] sm:$0xf]
    %v25 = vld [vmem:[%s1] sm:$0x1]
    %v27 = vlaneseq
    %v28 = vshrl.u32 %v27, 7
    %v29 = vsub.s32 0, %v28
    %v30 = vrot.slane %v25, %v29
    %v32 = vmul.f32 %v24, %v30
    %33 = vst [vmem:[#allocation5] sm:$0xf] %v32
    // Predicated region
    $region14: #{tpu_custom_call.1} parent=1 // pred_check
      _
    $region15: #{tpu_custom_call.1} parent=1 // pred_check_branch
      %35 = sbr.rel (0) target = $region17
    $region16: #{tpu_custom_call.1} parent=1 // pred_region
      %s37 = ssub.s32 64, 64
      %38 = vsyncadd [#allocation4], %s37
      %s40 = sshll.u32 [#allocation5], 4
      %s41 = int_to_ptr.vmem [resolvable:$true] %s40
      %43 = dma.vmem_to_hbm [thread:$0]  %s41, 64, %s2, [#allocation4]
    $region17: #{tpu_custom_call.1} parent=1 // pred_fallthru
      _
    // Predicated region
    $region18: #{tpu_custom_call.1} parent=1 // pred_check
      _
    $region19: #{tpu_custom_call.1} parent=1 // pred_check_branch
      %45 = sbr.rel (0) target = $region21
    $region20: #{tpu_custom_call.1} parent=1 // pred_region
      %46 = dma.done [#allocation4], 64
    $region21: #{tpu_custom_call.1} parent=1 // pred_fallthru
      _
    %47 = vsyncpa [#allocation3], 1
    %48 = vsyncpa [#allocation4], 1

</llo_original>
